<compile_context>
chip_gen: v5e
topology: v5e:2x2
jax: 0.10.0
libtpu: 0.0.40
codegen_flags: <defaults>
</compile_context>

<pallas_src>
import jax
import jax.numpy as jnp
from jax.experimental import pallas as pl
from jax.experimental.pallas import tpu as pltpu


def _linreg_kernel(x_ref, theta_ref, y_ref, o_ref):
    """Squared loss for all workers in one shot.

    x_ref:     (M, W*D)  worker-packed data (worker w owns lanes [w*D, (w+1)*D))
    theta_ref: (1, W*D)  worker-packed parameters
    y_ref:     (M, W)    targets
    o_ref:     (1, W)    per-worker mean squared error (lane-dense row)
    """
    M = x_ref.shape[0]
    W = o_ref.shape[-1]
    D = x_ref.shape[-1] // W
    inv_m = jnp.float32(1.0 / M)

    # One vreg-wide VPU multiply (all 128 lanes useful when W*D == 128).
    prod = x_ref[...] * theta_ref[...]                            # (M, W*D)

    # Segmented per-worker lane reduction (static unroll over W segments).
    pred = jnp.concatenate(
        [jnp.sum(prod[:, w * D:(w + 1) * D], axis=-1, keepdims=True)
         for w in range(W)],
        axis=-1)                                                  # (M, W)

    err = (pred - y_ref[...]) ** 2                                # (M, W)

    # Sublane reduce over the data axis; single unmasked lane-dense store.
    o_ref[...] = (jnp.sum(err, axis=0, keepdims=True) * inv_m).astype(o_ref.dtype)


def linear_regression_forward(X, theta, y):
    """Pallas equivalent of linear_regression.forward (decentralized).

    X:     (W, M, D)
    theta: (W, D, 1)
    y:     (W, M, 1)
    returns (W, 1) float32
    """
    W, M, D = X.shape
    assert theta.shape == (W, D, 1)
    assert y.shape == (W, M, 1)

    f32 = jnp.float32
    # Layout plumbing in the wrapper: pack all workers along the lane axis so
    # the kernel is lane-dense and no operand has a trailing size-1 dim.
    x_packed = X.astype(f32).transpose(1, 0, 2).reshape(M, W * D)   # (M, W*D)
    theta_packed = theta.astype(f32).reshape(1, W * D)              # (1, W*D)
    y_packed = y.astype(f32).reshape(W, M).T                        # (M, W)

    vmem = pl.BlockSpec(memory_space=pltpu.MemorySpace.VMEM)
    out = pl.pallas_call(
        _linreg_kernel,
        out_shape=jax.ShapeDtypeStruct((1, W), f32),
        in_specs=[vmem, vmem, vmem],
        out_specs=vmem,
    )(x_packed, theta_packed, y_packed)
    return out.reshape(W, 1)


def _reference(X, theta, y):
    pred = jnp.einsum("wmd,wdk->wmk", X, theta)      # bmm
    return jnp.mean((pred - y) ** 2, axis=1)         # (W, 1)


if __name__ == "__main__":
    # Small shapes consistent with the module: n_workers=4, n_data=8, dim=32.
    n_workers, n_data, dim = 4, 8, 32

    key = jax.random.PRNGKey(0)
    kx, ky, kt = jax.random.split(key, 3)

    X = jax.random.normal(kx, (n_workers, n_data, dim), dtype=jnp.float32)
    y = jax.random.normal(ky, (n_workers, n_data, 1), dtype=jnp.float32)
    theta = jax.random.normal(kt, (n_workers, dim, 1), dtype=jnp.float32)

    out = linear_regression_forward(X, theta, y)
    out = jax.block_until_ready(out)

    ref = _reference(X, theta, y)
    assert out.shape == (n_workers, 1)
    assert jnp.allclose(out, ref, rtol=1e-5, atol=1e-5)

    print("KERNEL_OK")
</pallas_src>

<mosaic_0001>
module attributes {stable_mosaic.version = 11 : i64} {
  func.func @_linreg_kernel(%arg0: memref<8x128xf32, #tpu.memory_space<vmem>>, %arg1: memref<1x128xf32, #tpu.memory_space<vmem>>, %arg2: memref<8x4xf32, #tpu.memory_space<vmem>>, %arg3: memref<1x4xf32, #tpu.memory_space<vmem>>) attributes {dimension_semantics = [], scalar_prefetch = 0 : i64, scratch_operands = 0 : i64, tpu.core_type = #tpu.core_type<tc>} {
    %c0 = arith.constant 0 : index
    %c0_0 = arith.constant 0 : index
    %0 = vector.load %arg0[%c0, %c0_0] : memref<8x128xf32, #tpu.memory_space<vmem>>, vector<8x128xf32>
    %c0_1 = arith.constant 0 : index
    %c0_2 = arith.constant 0 : index
    %1 = vector.load %arg1[%c0_1, %c0_2] : memref<1x128xf32, #tpu.memory_space<vmem>>, vector<1x128xf32>
    %2 = vector.broadcast %1 : vector<1x128xf32> to vector<8x128xf32>
    %3 = arith.mulf %0, %2 : vector<8x128xf32>
    %4 = vector.extract_strided_slice %3 {offsets = [0, 0], sizes = [8, 32], strides = [1, 1]} : vector<8x128xf32> to vector<8x32xf32>
    %cst = arith.constant dense<0.000000e+00> : vector<8xf32>
    %5 = vector.multi_reduction <add>, %4, %cst [1] : vector<8x32xf32> to vector<8xf32>
    %6 = vector.shape_cast %5 : vector<8xf32> to vector<8x1xf32>
    %7 = vector.extract_strided_slice %3 {offsets = [0, 32], sizes = [8, 32], strides = [1, 1]} : vector<8x128xf32> to vector<8x32xf32>
    %cst_3 = arith.constant dense<0.000000e+00> : vector<8xf32>
    %8 = vector.multi_reduction <add>, %7, %cst_3 [1] : vector<8x32xf32> to vector<8xf32>
    %9 = vector.shape_cast %8 : vector<8xf32> to vector<8x1xf32>
    %10 = vector.extract_strided_slice %3 {offsets = [0, 64], sizes = [8, 32], strides = [1, 1]} : vector<8x128xf32> to vector<8x32xf32>
    %cst_4 = arith.constant dense<0.000000e+00> : vector<8xf32>
    %11 = vector.multi_reduction <add>, %10, %cst_4 [1] : vector<8x32xf32> to vector<8xf32>
    %12 = vector.shape_cast %11 : vector<8xf32> to vector<8x1xf32>
    %13 = vector.extract_strided_slice %3 {offsets = [0, 96], sizes = [8, 32], strides = [1, 1]} : vector<8x128xf32> to vector<8x32xf32>
    %cst_5 = arith.constant dense<0.000000e+00> : vector<8xf32>
    %14 = vector.multi_reduction <add>, %13, %cst_5 [1] : vector<8x32xf32> to vector<8xf32>
    %15 = vector.shape_cast %14 : vector<8xf32> to vector<8x1xf32>
    %16 = tpu.concatenate %6, %9, %12, %15 in 1 : vector<8x1xf32>, vector<8x1xf32>, vector<8x1xf32>, vector<8x1xf32> -> vector<8x4xf32>
    %c0_6 = arith.constant 0 : index
    %c0_7 = arith.constant 0 : index
    %17 = vector.load %arg2[%c0_6, %c0_7] : memref<8x4xf32, #tpu.memory_space<vmem>>, vector<8x4xf32>
    %18 = arith.subf %16, %17 : vector<8x4xf32>
    %19 = arith.mulf %18, %18 : vector<8x4xf32>
    %cst_8 = arith.constant dense<0.000000e+00> : vector<4xf32>
    %20 = vector.multi_reduction <add>, %19, %cst_8 [0] : vector<8x4xf32> to vector<4xf32>
    %21 = vector.shape_cast %20 : vector<4xf32> to vector<1x4xf32>
    %cst_9 = arith.constant 1.250000e-01 : f32
    %22 = vector.broadcast %cst_9 : f32 to vector<1x4xf32>
    %23 = arith.mulf %21, %22 : vector<1x4xf32>
    %c0_10 = arith.constant 0 : index
    %c0_11 = arith.constant 0 : index
    %24 = vector.load %arg3[%c0_10, %c0_11] : memref<1x4xf32, #tpu.memory_space<vmem>>, vector<1x4xf32>
    tpu.vector_store %arg3[%c0_10, %c0_11], %23 {strides = array<i32>} : memref<1x4xf32, #tpu.memory_space<vmem>>, vector<1x4xf32>,
    return
  }
}

</mosaic_0001>

<llo_original>
// kernel: tpu_custom_call.1
$region0: #{tpu_custom_call.1}
  #allocation0 [shape = 'u32[]', space=smem, size = 0x4, offset = 0x4, fixed_abs, tag = 'smem constant byte address 0x4 - core index']
  #allocation1 [shape = 'u32[72,128]{1,0:T(1,128)}', space=vmem, size = 0x9000, scoped, tag = 'internal scratch']
  %s0 = inlined_call_operand.vmem [shape: f32[8,128], index: 0, kind: input, shape index: {}]
  %s1 = inlined_call_operand.vmem [shape: f32[1,128], index: 1, kind: input, shape index: {}]
  %s2 = inlined_call_operand.vmem [shape: f32[8,4], index: 2, kind: input, shape index: {}]
  %s3 = inlined_call_operand.hbm [shape: f32[1,4], index: 3, kind: output, shape index: {}]
  %s4 = sld [smem:[#allocation0]]
  $region22: #{tpu_custom_call.1} parent=0
    _
  %s6 = ssub.s32 1, %s4
  %s7 = scalar_select 0, %s6, %s4
  $region1: #{tpu_custom_call.1} parent=0
    #allocation2 [shape = 'u8[512]{0}', space=vmem, size = 0x400, scoped, tag = 'output window, operand 0, single buffered']
    #allocation3 [shape = 's32[1]{0}', space=sflag, size = 0x4, scoped, tag = 'scoped memory for tpu_custom_call.1']
    %8 = vsyncpa [#allocation3], 0
    // Predicated region
    $region2: #{tpu_custom_call.1} parent=1 // pred_check
      _
    $region3: #{tpu_custom_call.1} parent=1 // pred_check_branch
      %10 = sbr.rel (0) target = $region5
    $region4: #{tpu_custom_call.1} parent=1 // pred_region
      _
    $region5: #{tpu_custom_call.1} parent=1 // pred_fallthru
      _
    // Predicated region
    $region6: #{tpu_custom_call.1} parent=1 // pred_check
      _
    $region7: #{tpu_custom_call.1} parent=1 // pred_check_branch
      %12 = sbr.rel (0) target = $region9
    $region8: #{tpu_custom_call.1} parent=1 // pred_region
      _
    $region9: #{tpu_custom_call.1} parent=1 // pred_fallthru
      _
    // Predicated region
    $region10: #{tpu_custom_call.1} parent=1 // pred_check
      _
    $region11: #{tpu_custom_call.1} parent=1 // pred_check_branch
      %14 = sbr.rel (0) target = $region13
    $region12: #{tpu_custom_call.1} parent=1 // pred_region
      _
    $region13: #{tpu_custom_call.1} parent=1 // pred_fallthru
      _
    %v15 = vld [vmem:[%s0] sm:$0xff]
    %v16 = vld [vmem:[%s1] sm:$0x1]
    %v18 = vperm.slane %v16, 0
    %v20 = vmul.f32 %v15, %v18
    %vm21 = vcmask 261120
    %v22 = vsel %vm21, %v20, 0.0
    %23 = vadd.xlane.f32.xlu0 %v22
    %v24 = vpop.xlane.xlu0 %23
    %26 = vrot.lane.b32.xlu0 %v20, 96
    %v27 = vpop.permute.xlu0 %26
    %v29 = vsel %vm21, %v27, 0.0
    %30 = vadd.xlane.f32.xlu0 %v29
    %v31 = vpop.xlane.xlu0 %30
    %32 = vrot.lane.b32.xlu0 %v20, 64
    %v33 = vpop.permute.xlu0 %32
    %v35 = vsel %vm21, %v33, 0.0
    %36 = vadd.xlane.f32.xlu0 %v35
    %v37 = vpop.xlane.xlu0 %36
    %38 = vrot.lane.b32.xlu0 %v20, 32
    %v39 = vpop.permute.xlu0 %38
    %v41 = vsel %vm21, %v39, 0.0
    %42 = vadd.xlane.f32.xlu0 %v41
    %v43 = vpop.xlane.xlu0 %42
    %vm44 = vcmask 7168
    %v45 = vsel %vm44, %v24, %v31
    %vm46 = vcmask 15360
    %v47 = vsel %vm46, %v45, %v37
    %vm48 = vcmask 23552
    %v49 = vsel %vm48, %v47, %v43
    %v50 = vld [vmem:[%s2] sm:$0xff]
    %v51 = vsub.f32 %v49, %v50
    %v52 = vmul.f32 %v51, %v51
    %vm53 = vcmask 31744
    %v54 = vsel %vm53, %v52, 0.0
    %v55 = vrot.slane %v54, 4
    %v56 = vadd.f32 %v54, %v55
    %v57 = vrot.slane %v56, 2
    %v58 = vadd.f32 %v56, %v57
    %v59 = vrot.slane %v58, 1
    %v60 = vadd.f32 %v58, %v59
    %v61 = vmul.f32 %v60, 0.125
    %vm62 = vcmask 24576
    %63 = vst.msk [vmem:[#allocation2] sm:$0x1] %vm62, %v61
    // Predicated region
    $region14: #{tpu_custom_call.1} parent=1 // pred_check
      _
    $region15: #{tpu_custom_call.1} parent=1 // pred_check_branch
      %65 = sbr.rel (0) target = $region17
    $region16: #{tpu_custom_call.1} parent=1 // pred_region
      %67 = vsyncadd [#allocation3], 0
      %s69 = sshll.u32 [#allocation2], 4
      %s70 = int_to_ptr.vmem [resolvable:$true] %s69
      %s71 = sshll.u32 %s3, 4
      %s72 = int_to_ptr.hbm [resolvable:$true] %s71
      %74 = dma.vmem_to_hbm [thread:$0]  %s70, 16, %s72, [#allocation3]
    $region17: #{tpu_custom_call.1} parent=1 // pred_fallthru
      _
    // Predicated region
    $region18: #{tpu_custom_call.1} parent=1 // pred_check
      _
    $region19: #{tpu_custom_call.1} parent=1 // pred_check_branch
      %76 = sbr.rel (0) target = $region21
    $region20: #{tpu_custom_call.1} parent=1 // pred_region
      %78 = dma.done [#allocation3], 16
    $region21: #{tpu_custom_call.1} parent=1 // pred_fallthru
      _
    %79 = vsyncpa [#allocation3], 1

</llo_original>
